<compile_context>
chip_gen: v6e
topology: v6e:2x2x1
jax: 0.10.0
libtpu: 0.0.40
codegen_flags: <defaults>
</compile_context>

<pallas_src>
import functools

import jax
import jax.numpy as jnp
from jax import lax
from jax.experimental import pallas as pl
from jax.experimental.pallas import tpu as pltpu

_MIB = 1024 * 1024


# ----------------------------------------------------------------- kernels --

def graphnet_kernel(x_ref, w1_ref, b1_ref, w2_ref, b2_ref, o_ref):
    """Resident-weights path: whole F contraction in one grid step."""
    h = jnp.dot(x_ref[...], w1_ref[...], preferred_element_type=jnp.float32)
    h = jnp.maximum(h + b1_ref[...], 0.0)                       # f32
    out = jnp.dot(h.astype(w2_ref.dtype), w2_ref[...],
                  preferred_element_type=jnp.float32)
    o_ref[...] = (out + b2_ref[...]).astype(o_ref.dtype)


def graphnet_kernel_ktiled(x_ref, w1_ref, b1_ref, w2_ref, b2_ref, o_ref,
                           acc_ref, *, rem):
    """Large-F path: fc1 accumulated over the innermost (reduction) grid axis."""
    k = pl.program_id(1)
    nk = pl.num_programs(1)

    @pl.when(k == 0)
    def _init():
        acc_ref[...] = jnp.zeros_like(acc_ref)

    x_blk = x_ref[...]
    w1_blk = w1_ref[...]
    if rem:
        # F is not a multiple of tile_k: zero the ragged tail of the last K
        # block on BOTH operands (out-of-bounds reads are unspecified bits,
        # and 0 * garbage could be NaN).
        tile_k = x_blk.shape[1]
        limit = jnp.where(k == nk - 1, rem, tile_k)
        col = lax.broadcasted_iota(jnp.int32, x_blk.shape, 1)
        x_blk = jnp.where(col < limit, x_blk, jnp.zeros_like(x_blk))
        row = lax.broadcasted_iota(jnp.int32, w1_blk.shape, 0)
        w1_blk = jnp.where(row < limit, w1_blk, jnp.zeros_like(w1_blk))

    acc_ref[...] += jnp.dot(x_blk, w1_blk, preferred_element_type=jnp.float32)

    @pl.when(k == nk - 1)
    def _finalize():
        hid = jnp.maximum(acc_ref[...] + b1_ref[...], 0.0)      # f32
        out = jnp.dot(hid.astype(w2_ref.dtype), w2_ref[...],
                      preferred_element_type=jnp.float32)
        o_ref[...] = (out + b2_ref[...]).astype(o_ref.dtype)


# ----------------------------------------------------------------- wrapper --

def _round_up(v, m):
    return ((v + m - 1) // m) * m


def _vmem_capacity_bytes():
    try:
        cap = int(pltpu.get_tpu_info().vmem_capacity_bytes)
        if cap > 0:
            return cap
    except Exception:
        pass
    return 64 * _MIB  # conservative fallback (v7x per-core VMEM)


def _choose_rows(n, per_row_bytes, fixed_bytes, budget, cap_rows):
    rows = max(budget - fixed_bytes, 0) // max(per_row_bytes, 1)
    rows = min(rows, cap_rows)
    rows = max(8, (rows // 8) * 8)
    rows = min(rows, _round_up(n, 8))
    if n >= 128:  # keep >=2 grid steps so both v7x TensorCores get work
        rows = min(rows, _round_up(pl.cdiv(n, 2), 8))
    return max(8, rows)


def _weight_spec(shape, index_map, single_buffer):
    if single_buffer:
        # Constant index map across the grid -> one VMEM copy is enough.
        return pl.BlockSpec(shape, index_map, pipeline_mode=pl.Buffered(1))
    return pl.BlockSpec(shape, index_map)


def graphnet_forward(x, w1, b1, w2, b2, *, use_bf16=False,
                     force_k_tiling=False):
    """x: [N, F]; w1: [F, H]; b1: [H]; w2: [H, O]; b2: [O]  ->  [N, O] (f32)."""
    n, f = x.shape
    h = w1.shape[1]
    o = w2.shape[1]

    if use_bf16:
        # MXU operands in bf16; accumulation, biases, relu and output stay f32.
        x = x.astype(jnp.bfloat16)
        w1 = w1.astype(jnp.bfloat16)
        w2 = w2.astype(jnp.bfloat16)
    b1 = b1.reshape(1, h).astype(jnp.float32)
    b2 = b2.reshape(1, o).astype(jnp.float32)

    xsize = x.dtype.itemsize
    wsize = w1.dtype.itemsize

    capacity = _vmem_capacity_bytes()
    budget = int(capacity * 0.70)          # working-set target for tiling
    vmem_cap = int(capacity * 0.85)        # hard cap passed to Mosaic
    cap_rows = 1024 if capacity >= 96 * _MIB else 512

    cost = pl.CostEstimate(
        flops=2 * n * (f * h + h * o),
        transcendentals=0,
        bytes_accessed=(n * f * xsize + f * h * wsize + h * o * wsize
                        + 4 * (h + o) + 4 * n * o),
    )

    # Path selection: resident weights if even a minimal row tile fits with
    # worst-case (double-buffered) W1/W2 in VMEM, otherwise tile the F axis.
    resident_fixed = 2 * (f * h + h * o) * wsize + 2 * (h + o) * 4
    resident_per_row = 2 * f * xsize + h * 4 + 2 * o * 4
    k_tiled = force_k_tiling or (resident_fixed + 16 * resident_per_row > budget)

    if not k_tiled:
        tile_n = _choose_rows(n, resident_per_row, resident_fixed, budget,
                              cap_rows)
        vmem_needed = resident_fixed + tile_n * resident_per_row
        vmem_limit = int(min(vmem_cap, max(vmem_needed + 8 * _MIB, 32 * _MIB)))
        grid = (pl.cdiv(n, tile_n),)

        def run(single_buffer):
            return pl.pallas_call(
                graphnet_kernel,
                out_shape=jax.ShapeDtypeStruct((n, o), jnp.float32),
                grid=grid,
                in_specs=[
                    pl.BlockSpec((tile_n, f), lambda i: (i, 0)),      # x rows
                    _weight_spec((f, h), lambda i: (0, 0), single_buffer),
                    _weight_spec((1, h), lambda i: (0, 0), single_buffer),
                    _weight_spec((h, o), lambda i: (0, 0), single_buffer),
                    _weight_spec((1, o), lambda i: (0, 0), single_buffer),
                ],
                out_specs=pl.BlockSpec((tile_n, o), lambda i: (i, 0)),
                compiler_params=pltpu.CompilerParams(
                    dimension_semantics=("parallel",),
                    vmem_limit_bytes=vmem_limit),
                cost_estimate=cost,
            )(x, w1, b1, w2, b2)
    else:
        if f >= 1024:
            tile_k = 1024
        elif f >= 128:
            tile_k = (f // 128) * 128   # multiple of 128, never exceeds F
        else:
            tile_k = f                  # full extent (only under forcing)
        ktiled_fixed = (2 * tile_k * h * wsize + 2 * h * o * wsize
                        + 2 * (h + o) * 4)
        ktiled_per_row = 2 * tile_k * xsize + h * 4 + 2 * o * 4
        tile_n = _choose_rows(n, ktiled_per_row, ktiled_fixed, budget, cap_rows)
        vmem_needed = ktiled_fixed + tile_n * ktiled_per_row
        vmem_limit = int(min(vmem_cap, max(vmem_needed + 8 * _MIB, 32 * _MIB)))
        grid = (pl.cdiv(n, tile_n), pl.cdiv(f, tile_k))
        kernel = functools.partial(graphnet_kernel_ktiled, rem=f % tile_k)

        def run(single_buffer):
            return pl.pallas_call(
                kernel,
                out_shape=jax.ShapeDtypeStruct((n, o), jnp.float32),
                grid=grid,
                in_specs=[
                    pl.BlockSpec((tile_n, tile_k), lambda i, k: (i, k)),  # x
                    pl.BlockSpec((tile_k, h), lambda i, k: (k, 0)),       # w1
                    _weight_spec((1, h), lambda i, k: (0, 0), single_buffer),
                    _weight_spec((h, o), lambda i, k: (0, 0), single_buffer),
                    _weight_spec((1, o), lambda i, k: (0, 0), single_buffer),
                ],
                out_specs=pl.BlockSpec((tile_n, o), lambda i, k: (i, 0)),
                scratch_shapes=[pltpu.VMEM((tile_n, h), jnp.float32)],
                compiler_params=pltpu.CompilerParams(
                    dimension_semantics=("parallel", "arbitrary"),
                    vmem_limit_bytes=vmem_limit),
                cost_estimate=cost,
            )(x, w1, b1, w2, b2)

    try:
        return run(True)
    except Exception:
        # pipeline_mode=pl.Buffered(1) not supported by this JAX/Mosaic build;
        # the VMEM budget already assumed double-buffered weights, so default
        # pipelining is safe.
        return run(False)


def init_params(key, input_size, hidden_size, output_size):
    """nn.Linear-style init (uniform +-1/sqrt(fan_in)), weights as [in, out]."""
    k1, k2, k3, k4 = jax.random.split(key, 4)
    bound1 = 1.0 / jnp.sqrt(jnp.float32(input_size))
    bound2 = 1.0 / jnp.sqrt(jnp.float32(hidden_size))
    w1 = jax.random.uniform(k1, (input_size, hidden_size), jnp.float32,
                            -bound1, bound1)
    b1 = jax.random.uniform(k2, (hidden_size,), jnp.float32, -bound1, bound1)
    w2 = jax.random.uniform(k3, (hidden_size, output_size), jnp.float32,
                            -bound2, bound2)
    b2 = jax.random.uniform(k4, (output_size,), jnp.float32, -bound2, bound2)
    return w1, b1, w2, b2


if __name__ == "__main__":
    # The original module feeds rows of a (binary) adjacency matrix:
    # input_size = adjacency_matrix.shape[0].  Small synthetic graph.
    num_nodes = 32          # N == F (input_size)
    hidden_size = 16
    output_size = 2

    key = jax.random.PRNGKey(0)
    k_adj, k_params = jax.random.split(key)

    a = (jax.random.uniform(k_adj, (num_nodes, num_nodes)) < 0.2).astype(
        jnp.float32)
    x = jnp.maximum(a, a.T)                     # symmetric adjacency, [N, F]
    w1, b1, w2, b2 = init_params(k_params, num_nodes, hidden_size, output_size)
    ref = jnp.maximum(x @ w1 + b1, 0.0) @ w2 + b2

    # f32 resident-weights path (matches the PyTorch forward numerics).
    out = graphnet_forward(x, w1, b1, w2, b2)
    jax.block_until_ready(out)
    assert out.shape == (num_nodes, output_size)
    assert jnp.allclose(out, ref, atol=1e-5, rtol=1e-5)

    # Optional bf16 MXU path (weights rounded to bf16 -> looser tolerance).
    out_bf16 = graphnet_forward(x, w1, b1, w2, b2, use_bf16=True)
    jax.block_until_ready(out_bf16)
    assert jnp.allclose(out_bf16, ref, atol=5e-2, rtol=5e-2)

    # Exercise the K-tiled (large-F) path on a ragged N / ragged F problem.
    n2, f2 = 200, 1573
    k_x2, k_p2 = jax.random.split(jax.random.PRNGKey(2))
    x2 = jax.random.normal(k_x2, (n2, f2), jnp.float32)
    w1b, b1b, w2b, b2b = init_params(k_p2, f2, hidden_size, output_size)
    ref2 = jnp.maximum(x2 @ w1b + b1b, 0.0) @ w2b + b2b
    out2 = graphnet_forward(x2, w1b, b1b, w2b, b2b, force_k_tiling=True)
    jax.block_until_ready(out2)
    assert out2.shape == (n2, output_size)
    assert jnp.allclose(out2, ref2, atol=2e-2, rtol=2e-2)

    print("KERNEL_OK")
</pallas_src>

<mosaic_0001>
module attributes {stable_mosaic.version = 11 : i64} {
  func.func @graphnet_kernel(%arg0: i32, %arg1: memref<32x32xf32, #tpu.memory_space<vmem>>, %arg2: memref<32x16xf32, #tpu.memory_space<vmem>>, %arg3: memref<1x16xf32, #tpu.memory_space<vmem>>, %arg4: memref<16x2xf32, #tpu.memory_space<vmem>>, %arg5: memref<1x2xf32, #tpu.memory_space<vmem>>, %arg6: memref<32x2xf32, #tpu.memory_space<vmem>>) attributes {dimension_semantics = [#tpu.dimension_semantics<parallel>], iteration_bounds = array<i64: 1>, scalar_prefetch = 0 : i64, scratch_operands = 0 : i64, tpu.core_type = #tpu.core_type<tc>, window_params = [{transform_indices = @transform_0, window_bounds = array<i64: 32, 32>}, {pipeline_mode = #tpu.pipeline_mode<synchronous>, transform_indices = @transform_1, window_bounds = array<i64: 32, 16>}, {pipeline_mode = #tpu.pipeline_mode<synchronous>, transform_indices = @transform_2, window_bounds = array<i64: 1, 16>}, {pipeline_mode = #tpu.pipeline_mode<synchronous>, transform_indices = @transform_3, window_bounds = array<i64: 16, 2>}, {pipeline_mode = #tpu.pipeline_mode<synchronous>, transform_indices = @transform_4, window_bounds = array<i64: 1, 2>}, {transform_indices = @transform_5, window_bounds = array<i64: 32, 2>}]} {
    %c0 = arith.constant 0 : index
    %c0_0 = arith.constant 0 : index
    %0 = vector.load %arg1[%c0, %c0_0] : memref<32x32xf32, #tpu.memory_space<vmem>>, vector<32x32xf32>
    %c0_1 = arith.constant 0 : index
    %c0_2 = arith.constant 0 : index
    %1 = vector.load %arg2[%c0_1, %c0_2] : memref<32x16xf32, #tpu.memory_space<vmem>>, vector<32x16xf32>
    %cst = arith.constant dense<0.000000e+00> : vector<32x16xf32>
    %2 = tpu.matmul %0, %1, %cst {dimension_numbers = #tpu.dot_dimension_numbers<[1], [0], [0], [1], [0, 0, 1, 1], [], []>} : vector<32x32xf32>, vector<32x16xf32>, vector<32x16xf32> -> vector<32x16xf32>
    %c0_3 = arith.constant 0 : index
    %c0_4 = arith.constant 0 : index
    %3 = vector.load %arg3[%c0_3, %c0_4] : memref<1x16xf32, #tpu.memory_space<vmem>>, vector<1x16xf32>
    %4 = vector.broadcast %3 : vector<1x16xf32> to vector<32x16xf32>
    %5 = arith.addf %2, %4 : vector<32x16xf32>
    %cst_5 = arith.constant 0.000000e+00 : f32
    %6 = vector.broadcast %cst_5 : f32 to vector<32x16xf32>
    %7 = arith.maximumf %5, %6 : vector<32x16xf32>
    %c0_6 = arith.constant 0 : index
    %c0_7 = arith.constant 0 : index
    %8 = vector.load %arg4[%c0_6, %c0_7] : memref<16x2xf32, #tpu.memory_space<vmem>>, vector<16x2xf32>
    %cst_8 = arith.constant dense<0.000000e+00> : vector<32x2xf32>
    %9 = tpu.matmul %7, %8, %cst_8 {dimension_numbers = #tpu.dot_dimension_numbers<[1], [0], [0], [1], [0, 0, 1, 1], [], []>} : vector<32x16xf32>, vector<16x2xf32>, vector<32x2xf32> -> vector<32x2xf32>
    %c0_9 = arith.constant 0 : index
    %c0_10 = arith.constant 0 : index
    %10 = vector.load %arg5[%c0_9, %c0_10] : memref<1x2xf32, #tpu.memory_space<vmem>>, vector<1x2xf32>
    %11 = vector.broadcast %10 : vector<1x2xf32> to vector<32x2xf32>
    %12 = arith.addf %9, %11 : vector<32x2xf32>
    %c0_11 = arith.constant 0 : index
    %c0_12 = arith.constant 0 : index
    %13 = vector.load %arg6[%c0_11, %c0_12] : memref<32x2xf32, #tpu.memory_space<vmem>>, vector<32x2xf32>
    tpu.vector_store %arg6[%c0_11, %c0_12], %12 {strides = array<i32>} : memref<32x2xf32, #tpu.memory_space<vmem>>, vector<32x2xf32>,
    return
  }
  func.func @transform_0(%arg0: i32) -> (i32, i32) {
    %c0_i32 = arith.constant 0 : i32
    %c0_i32_0 = arith.constant 0 : i32
    return %arg0, %c0_i32 : i32, i32
  }
  func.func @transform_1(%arg0: i32) -> (i32, i32) {
    %c0_i32 = arith.constant 0 : i32
    %c0_i32_0 = arith.constant 0 : i32
    %c0_i32_1 = arith.constant 0 : i32
    return %c0_i32, %c0_i32_0 : i32, i32
  }
  func.func @transform_2(%arg0: i32) -> (i32, i32) {
    %c0_i32 = arith.constant 0 : i32
    %c0_i32_0 = arith.constant 0 : i32
    %c0_i32_1 = arith.constant 0 : i32
    return %c0_i32, %c0_i32_0 : i32, i32
  }
  func.func @transform_3(%arg0: i32) -> (i32, i32) {
    %c0_i32 = arith.constant 0 : i32
    %c0_i32_0 = arith.constant 0 : i32
    %c0_i32_1 = arith.constant 0 : i32
    return %c0_i32, %c0_i32_0 : i32, i32
  }
  func.func @transform_4(%arg0: i32) -> (i32, i32) {
    %c0_i32 = arith.constant 0 : i32
    %c0_i32_0 = arith.constant 0 : i32
    %c0_i32_1 = arith.constant 0 : i32
    return %c0_i32, %c0_i32_0 : i32, i32
  }
  func.func @transform_5(%arg0: i32) -> (i32, i32) {
    %c0_i32 = arith.constant 0 : i32
    %c0_i32_0 = arith.constant 0 : i32
    return %arg0, %c0_i32 : i32, i32
  }
}

module attributes {stable_mosaic.version = 11 : i64} {
  func.func @graphnet_kernel(%arg0: i32, %arg1: memref<32x32xf32, #tpu.memory_space<vmem>>, %arg2: memref<32x16xf32, #tpu.memory_space<vmem>>, %arg3: memref<1x16xf32, #tpu.memory_space<vmem>>, %arg4: memref<16x2xf32, #tpu.memory_space<vmem>>, %arg5: memref<1x2xf32, #tpu.memory_space<vmem>>, %arg6: memref<32x2xf32, #tpu.memory_space<vmem>>) attributes {dimension_semantics = [#tpu.dimension_semantics<parallel>], iteration_bounds = array<i64: 1>, scalar_prefetch = 0 : i64, scratch_operands = 0 : i64, tpu.core_type = #tpu.core_type<tc>, window_params = [{transform_indices = @transform_0, window_bounds = array<i64: 32, 32>}, {pipeline_mode = #tpu.pipeline_mode<synchronous>, transform_indices = @transform_1, window_bounds = array<i64: 32, 16>}, {pipeline_mode = #tpu.pipeline_mode<synchronous>, transform_indices = @transform_2, window_bounds = array<i64: 1, 16>}, {pipeline_mode = #tpu.pipeline_mode<synchronous>, transform_indices = @transform_3, window_bounds = array<i64: 16, 2>}, {pipeline_mode = #tpu.pipeline_mode<synchronous>, transform_indices = @transform_4, window_bounds = array<i64: 1, 2>}, {transform_indices = @transform_5, window_bounds = array<i64: 32, 2>}]} {
    %c0 = arith.constant 0 : index
    %c0_0 = arith.constant 0 : index
    %0 = vector.load %arg1[%c0, %c0_0] : memref<32x32xf32, #tpu.memory_space<vmem>>, vector<32x32xf32>
    %c0_1 = arith.constant 0 : index
    %c0_2 = arith.constant 0 : index
    %1 = vector.load %arg2[%c0_1, %c0_2] : memref<32x16xf32, #tpu.memory_space<vmem>>, vector<32x16xf32>
    %cst = arith.constant dense<0.000000e+00> : vector<32x16xf32>
    %2 = tpu.matmul %0, %1, %cst {dimension_numbers = #tpu.dot_dimension_numbers<[1], [0], [0], [1], [0, 0, 1, 1], [], []>} : vector<32x32xf32>, vector<32x16xf32>, vector<32x16xf32> -> vector<32x16xf32>
    %c0_3 = arith.constant 0 : index
    %c0_4 = arith.constant 0 : index
    %3 = vector.load %arg3[%c0_3, %c0_4] : memref<1x16xf32, #tpu.memory_space<vmem>>, vector<1x16xf32>
    %4 = vector.broadcast %3 : vector<1x16xf32> to vector<32x16xf32>
    %5 = arith.addf %2, %4 : vector<32x16xf32>
    %cst_5 = arith.constant 0.000000e+00 : f32
    %6 = vector.broadcast %cst_5 : f32 to vector<32x16xf32>
    %7 = arith.maximumf %5, %6 : vector<32x16xf32>
    %c0_6 = arith.constant 0 : index
    %c0_7 = arith.constant 0 : index
    %8 = vector.load %arg4[%c0_6, %c0_7] : memref<16x2xf32, #tpu.memory_space<vmem>>, vector<16x2xf32>
    %cst_8 = arith.constant dense<0.000000e+00> : vector<32x2xf32>
    %9 = tpu.matmul %7, %8, %cst_8 {dimension_numbers = #tpu.dot_dimension_numbers<[1], [0], [0], [1], [0, 0, 1, 1], [], []>} : vector<32x16xf32>, vector<16x2xf32>, vector<32x2xf32> -> vector<32x2xf32>
    %c0_9 = arith.constant 0 : index
    %c0_10 = arith.constant 0 : index
    %10 = vector.load %arg5[%c0_9, %c0_10] : memref<1x2xf32, #tpu.memory_space<vmem>>, vector<1x2xf32>
    %11 = vector.broadcast %10 : vector<1x2xf32> to vector<32x2xf32>
    %12 = arith.addf %9, %11 : vector<32x2xf32>
    %c0_11 = arith.constant 0 : index
    %c0_12 = arith.constant 0 : index
    %13 = vector.load %arg6[%c0_11, %c0_12] : memref<32x2xf32, #tpu.memory_space<vmem>>, vector<32x2xf32>
    tpu.vector_store %arg6[%c0_11, %c0_12], %12 {strides = array<i32>} : memref<32x2xf32, #tpu.memory_space<vmem>>, vector<32x2xf32>,
    return
  }
  func.func @transform_0(%arg0: i32) -> (i32, i32) {
    %c0_i32 = arith.constant 0 : i32
    %c0_i32_0 = arith.constant 0 : i32
    return %arg0, %c0_i32 : i32, i32
  }
  func.func @transform_1(%arg0: i32) -> (i32, i32) {
    %c0_i32 = arith.constant 0 : i32
    %c0_i32_0 = arith.constant 0 : i32
    %c0_i32_1 = arith.constant 0 : i32
    return %c0_i32, %c0_i32_0 : i32, i32
  }
  func.func @transform_2(%arg0: i32) -> (i32, i32) {
    %c0_i32 = arith.constant 0 : i32
    %c0_i32_0 = arith.constant 0 : i32
    %c0_i32_1 = arith.constant 0 : i32
    return %c0_i32, %c0_i32_0 : i32, i32
  }
  func.func @transform_3(%arg0: i32) -> (i32, i32) {
    %c0_i32 = arith.constant 0 : i32
    %c0_i32_0 = arith.constant 0 : i32
    %c0_i32_1 = arith.constant 0 : i32
    return %c0_i32, %c0_i32_0 : i32, i32
  }
  func.func @transform_4(%arg0: i32) -> (i32, i32) {
    %c0_i32 = arith.constant 0 : i32
    %c0_i32_0 = arith.constant 0 : i32
    %c0_i32_1 = arith.constant 0 : i32
    return %c0_i32, %c0_i32_0 : i32, i32
  }
  func.func @transform_5(%arg0: i32) -> (i32, i32) {
    %c0_i32 = arith.constant 0 : i32
    %c0_i32_0 = arith.constant 0 : i32
    return %arg0, %c0_i32 : i32, i32
  }
}

</mosaic_0001>

<llo_original>
// kernel: tpu_custom_call.1
$region0: #{tpu_custom_call.1}
  #allocation0 [shape = 'u32[]', space=smem, size = 0x4, offset = 0x4, fixed_abs, tag = 'smem constant byte address 0x4 - core index']
  #allocation1 [shape = 'u32[144,128]{1,0:T(1,128)}', space=vmem, size = 0x12000, scoped, tag = 'internal scratch']
  %s0 = inlined_call_operand.vmem [shape: f32[32,32], index: 0, kind: input, shape index: {}]
  %s1 = inlined_call_operand.vmem [shape: f32[32,16], index: 1, kind: input, shape index: {}]
  %s2 = inlined_call_operand.vmem [shape: f32[1,16], index: 2, kind: input, shape index: {}]
  %s3 = inlined_call_operand.vmem [shape: f32[16,2], index: 3, kind: input, shape index: {}]
  %s4 = inlined_call_operand.vmem [shape: f32[1,2], index: 4, kind: input, shape index: {}]
  %s5 = inlined_call_operand.vmem [shape: f32[32,2], index: 5, kind: output, shape index: {}]
  %s6 = sld [smem:[#allocation0]]
  $region30: #{tpu_custom_call.1} parent=0
    _
  %s8 = ssub.s32 1, %s6
  %s9 = scalar_select 0, %s8, %s6
  // Predicated region
  $region2: #{tpu_custom_call.1} parent=0 // pred_check
    _
  $region3: #{tpu_custom_call.1} parent=0 // pred_check_branch
    %11 = sbr.rel (0) target = $region5
  $region4: #{tpu_custom_call.1} parent=0 // pred_region
    _
  $region5: #{tpu_custom_call.1} parent=0 // pred_fallthru
    _
  // Predicated region
  $region6: #{tpu_custom_call.1} parent=0 // pred_check
    _
  $region7: #{tpu_custom_call.1} parent=0 // pred_check_branch
    %13 = sbr.rel (0) target = $region9
  $region8: #{tpu_custom_call.1} parent=0 // pred_region
    _
  $region9: #{tpu_custom_call.1} parent=0 // pred_fallthru
    _
  // Predicated region
  $region10: #{tpu_custom_call.1} parent=0 // pred_check
    _
  $region11: #{tpu_custom_call.1} parent=0 // pred_check_branch
    %15 = sbr.rel (0) target = $region13
  $region12: #{tpu_custom_call.1} parent=0 // pred_region
    _
  $region13: #{tpu_custom_call.1} parent=0 // pred_fallthru
    _
  // Predicated region
  $region14: #{tpu_custom_call.1} parent=0 // pred_check
    _
  $region15: #{tpu_custom_call.1} parent=0 // pred_check_branch
    %17 = sbr.rel (0) target = $region17
  $region16: #{tpu_custom_call.1} parent=0 // pred_region
    _
  $region17: #{tpu_custom_call.1} parent=0 // pred_fallthru
    _
  // Predicated region
  $region18: #{tpu_custom_call.1} parent=0 // pred_check
    _
  $region19: #{tpu_custom_call.1} parent=0 // pred_check_branch
    %19 = sbr.rel (0) target = $region21
  $region20: #{tpu_custom_call.1} parent=0 // pred_region
    _
  $region21: #{tpu_custom_call.1} parent=0 // pred_fallthru
    _
  %v20 = vld [vmem:[%s0] sm:$0xff]
  %v21 = vld [vmem:[%s0 + $0x8] sm:$0xff]
  %v22 = vld [vmem:[%s0 + $0x10] sm:$0xff]
  %v23 = vld [vmem:[%s0 + $0x18] sm:$0xff]
  %v24 = vld [vmem:[%s1] sm:$0xff]
  %v25 = vld [vmem:[%s1 + $0x8] sm:$0xff]
  %v26 = vld [vmem:[%s1 + $0x10] sm:$0xff]
  %v27 = vld [vmem:[%s1 + $0x18] sm:$0xff]
  %v28 = vld [vmem:[%s2] sm:$0x1]
  %v30 = vlaneseq
  %v31 = vshrl.u32 %v30, 7
  %v32 = vsub.s32 0, %v31
  %v33 = vrot.slane %v28, %v32
  %vm35 = vcmask 261120
  %v37 = vsel %vm35, %v20, 0
  %v40 = vsel %vm35, %v21, 0
  %v43 = vsel %vm35, %v22, 0
  %v46 = vsel %vm35, %v23, 0
  %48 = vmatprep.subr.mxu0 0.0
  %49 = vmatpush1.msra.mxu0 0.0
  %50 = vmatprep.subr.mxu0 0.0
  %51 = vmatpush1.msra.mxu0 0.0
  %52 = vmatprep.subr.mxu0 0.0
  %53 = vmatpush1.msra.mxu0 0.0
  %54 = vmatprep.subr.mxu0 0.0
  %55 = vmatpush1.msra.mxu0 0.0
  %56 = vmatprep.subr.mxu0 0.0
  %57 = vmatpush1.msra.mxu0 0.0
  %58 = vmatprep.subr.mxu0 0.0
  %59 = vmatpush1.msra.mxu0 0.0
  %60 = vmatprep.subr.mxu0 0.0
  %61 = vmatpush1.msra.mxu0 0.0
  %62 = vmatprep.subr.mxu0 0.0
  %63 = vmatpush1.msra.mxu0 0.0
  %64 = vmatprep.subr.mxu0 0.0
  %65 = vmatpush1.msra.mxu0 0.0
  %66 = vmatprep.subr.mxu0 0.0
  %67 = vmatpush1.msra.mxu0 0.0
  %68 = vmatprep.subr.mxu0 0.0
  %69 = vmatpush1.msra.mxu0 0.0
  %70 = vmatprep.subr.mxu0 0.0
  %71 = vmatpush1.msra.mxu0 0.0
  %72 = vmatprep.subr.mxu0 0.0
  %73 = vmatpush1.msra.mxu0 %v27
  %74 = vmatprep.subr.mxu0 0.0
  %75 = vmatpush1.msra.mxu0 %v26
  %76 = vmatprep.subr.mxu0 0.0
  %77 = vmatpush1.msra.mxu0 %v25
  %78 = vmatprep.subr.mxu0 0.0
  %79 = vmatpush1.msra.mxu0 %v24
  %80 = vmatprep.subr.mxu0 0.0
  %81 = vmatpush2.msra.mxu0 0.0
  %82 = vmatprep.subr.mxu0 0.0
  %83 = vmatpush2.msra.mxu0 0.0
  %84 = vmatprep.subr.mxu0 0.0
  %85 = vmatpush2.msra.mxu0 0.0
  %86 = vmatprep.subr.mxu0 0.0
  %87 = vmatpush2.msra.mxu0 0.0
  %88 = vmatprep.subr.mxu0 0.0
  %89 = vmatpush2.msra.mxu0 0.0
  %90 = vmatprep.subr.mxu0 0.0
  %91 = vmatpush2.msra.mxu0 0.0
  %92 = vmatprep.subr.mxu0 0.0
  %93 = vmatpush2.msra.mxu0 0.0
  %94 = vmatprep.subr.mxu0 0.0
  %95 = vmatpush2.msra.mxu0 0.0
  %96 = vmatprep.subr.mxu0 0.0
  %97 = vmatpush2.msra.mxu0 0.0
  %98 = vmatprep.subr.mxu0 0.0
  %99 = vmatpush2.msra.mxu0 0.0
  %100 = vmatprep.subr.mxu0 0.0
  %101 = vmatpush2.msra.mxu0 0.0
  %102 = vmatprep.subr.mxu0 0.0
  %103 = vmatpush2.msra.mxu0 0.0
  %104 = vmatprep.subr.mxu0 0.0
  %105 = vmatpush2.msra.mxu0 0.0
  %106 = vmatprep.subr.mxu0 0.0
  %107 = vmatpush2.msra.mxu0 0.0
  %108 = vmatprep.subr.mxu0 0.0
  %109 = vmatpush2.msra.mxu0 0.0
  %110 = vmatprep.subr.mxu0 0.0
  %111 = vmatpush2.msra.mxu0 0.0
  %112 = vmatprep.mubr.f32.mxu0 0.0
  %113 = vmatmul.mubr.f32.gmra.mxu0 %v37
  %v114 = vpop.f32.mrf.mxu0
  %v115 = vadd.f32 %v33, %v114
  %v116 = vpop.f32.mrf.mxu0
  %117 = vmatprep.mubr.f32.mxu0 0.0
  %118 = vmatmul.mubr.f32.gmra.mxu0 %v40
  %v119 = vpop.f32.mrf.mxu0
  %v120 = vadd.f32 %v33, %v119
  %v121 = vpop.f32.mrf.mxu0
  %122 = vmatprep.mubr.f32.mxu0 0.0
  %123 = vmatmul.mubr.f32.gmra.mxu0 %v43
  %v124 = vpop.f32.mrf.mxu0
  %v125 = vadd.f32 %v33, %v124
  %v126 = vpop.f32.mrf.mxu0
  %127 = vmatprep.mubr.f32.mxu0 0.0
  %128 = vmatmul.mubr.f32.gmra.mxu0 %v46
  %v129 = vpop.f32.mrf.mxu0
  %v130 = vadd.f32 %v33, %v129
  %v131 = vpop.f32.mrf.mxu0
  %132 = vdwg.mxu0
  %v133 = vmax.f32 %v115, 0.0
  %v134 = vmax.f32 %v120, 0.0
  %v135 = vmax.f32 %v125, 0.0
  %v136 = vmax.f32 %v130, 0.0
  %v137 = vld [vmem:[%s3] sm:$0xff]
  %v138 = vld [vmem:[%s3 + $0x8] sm:$0xff]
  %v139 = vld [vmem:[%s4] sm:$0x1]
  %v141 = vlaneseq
  %v142 = vshrl.u32 %v141, 7
  %v143 = vsub.s32 0, %v142
  %v144 = vrot.slane %v139, %v143
  %vm146 = vcmask 130048
  %v148 = vsel %vm146, %v133, 0
  %v151 = vsel %vm146, %v134, 0
  %v154 = vsel %vm146, %v135, 0
  %v157 = vsel %vm146, %v136, 0
  %159 = vmatprep.subr.mxu0 0.0
  %160 = vmatpush1.msra.mxu0 0.0
  %161 = vmatprep.subr.mxu0 0.0
  %162 = vmatpush1.msra.mxu0 0.0
  %163 = vmatprep.subr.mxu0 0.0
  %164 = vmatpush1.msra.mxu0 0.0
  %165 = vmatprep.subr.mxu0 0.0
  %166 = vmatpush1.msra.mxu0 0.0
  %167 = vmatprep.subr.mxu0 0.0
  %168 = vmatpush1.msra.mxu0 0.0
  %169 = vmatprep.subr.mxu0 0.0
  %170 = vmatpush1.msra.mxu0 0.0
  %171 = vmatprep.subr.mxu0 0.0
  %172 = vmatpush1.msra.mxu0 0.0
  %173 = vmatprep.subr.mxu0 0.0
  %174 = vmatpush1.msra.mxu0 0.0
  %175 = vmatprep.subr.mxu0 0.0
  %176 = vmatpush1.msra.mxu0 0.0
  %177 = vmatprep.subr.mxu0 0.0
  %178 = vmatpush1.msra.mxu0 0.0
  %179 = vmatprep.subr.mxu0 0.0
  %180 = vmatpush1.msra.mxu0 0.0
  %181 = vmatprep.subr.mxu0 0.0
  %182 = vmatpush1.msra.mxu0 0.0
  %183 = vmatprep.subr.mxu0 0.0
  %184 = vmatpush1.msra.mxu0 0.0
  %185 = vmatprep.subr.mxu0 0.0
  %186 = vmatpush1.msra.mxu0 0.0
  %187 = vmatprep.subr.mxu0 0.0
  %188 = vmatpush1.msra.mxu0 %v138
  %189 = vmatprep.subr.mxu0 0.0
  %190 = vmatpush1.msra.mxu0 %v137
  %191 = vmatprep.subr.mxu0 0.0
  %192 = vmatpush2.msra.mxu0 0.0
  %193 = vmatprep.subr.mxu0 0.0
  %194 = vmatpush2.msra.mxu0 0.0
  %195 = vmatprep.subr.mxu0 0.0
  %196 = vmatpush2.msra.mxu0 0.0
  %197 = vmatprep.subr.mxu0 0.0
  %198 = vmatpush2.msra.mxu0 0.0
  %199 = vmatprep.subr.mxu0 0.0
  %200 = vmatpush2.msra.mxu0 0.0
  %201 = vmatprep.subr.mxu0 0.0
  %202 = vmatpush2.msra.mxu0 0.0
  %203 = vmatprep.subr.mxu0 0.0
  %204 = vmatpush2.msra.mxu0 0.0
  %205 = vmatprep.subr.mxu0 0.0
  %206 = vmatpush2.msra.mxu0 0.0
  %207 = vmatprep.subr.mxu0 0.0
  %208 = vmatpush2.msra.mxu0 0.0
  %209 = vmatprep.subr.mxu0 0.0
  %210 = vmatpush2.msra.mxu0 0.0
  %211 = vmatprep.subr.mxu0 0.0
  %212 = vmatpush2.msra.mxu0 0.0
  %213 = vmatprep.subr.mxu0 0.0
  %214 = vmatpush2.msra.mxu0 0.0
  %215 = vmatprep.subr.mxu0 0.0
  %216 = vmatpush2.msra.mxu0 0.0
  %217 = vmatprep.subr.mxu0 0.0
  %218 = vmatpush2.msra.mxu0 0.0
  %219 = vmatprep.subr.mxu0 0.0
  %220 = vmatpush2.msra.mxu0 0.0
  %221 = vmatprep.subr.mxu0 0.0
  %222 = vmatpush2.msra.mxu0 0.0
  %223 = vmatprep.mubr.f32.mxu0 0.0
  %224 = vmatmul.mubr.f32.gmra.mxu0 %v148
  %v225 = vpop.f32.mrf.mxu0
  %v226 = vadd.f32 %v144, %v225
  %v227 = vpop.f32.mrf.mxu0
  %228 = vmatprep.mubr.f32.mxu0 0.0
  %229 = vmatmul.mubr.f32.gmra.mxu0 %v151
  %v230 = vpop.f32.mrf.mxu0
  %v231 = vadd.f32 %v144, %v230
  %v232 = vpop.f32.mrf.mxu0
  %233 = vmatprep.mubr.f32.mxu0 0.0
  %234 = vmatmul.mubr.f32.gmra.mxu0 %v154
  %v235 = vpop.f32.mrf.mxu0
  %v236 = vadd.f32 %v144, %v235
  %v237 = vpop.f32.mrf.mxu0
  %238 = vmatprep.mubr.f32.mxu0 0.0
  %239 = vmatmul.mubr.f32.gmra.mxu0 %v157
  %v240 = vpop.f32.mrf.mxu0
  %v241 = vadd.f32 %v144, %v240
  %v242 = vpop.f32.mrf.mxu0
  %243 = vdwg.mxu0
  %vm244 = vcmask 15360
  %245 = vst.msk [vmem:[%s5] sm:$0xff] %vm244, %v226
  %246 = vst.msk [vmem:[%s5 + $0x8] sm:$0xff] %vm244, %v231
  %247 = vst.msk [vmem:[%s5 + $0x10] sm:$0xff] %vm244, %v236
  %248 = vst.msk [vmem:[%s5 + $0x18] sm:$0xff] %vm244, %v241
  // Predicated region
  $region22: #{tpu_custom_call.1} parent=0 // pred_check
    _
  $region23: #{tpu_custom_call.1} parent=0 // pred_check_branch
    %250 = sbr.rel (0) target = $region25
  $region24: #{tpu_custom_call.1} parent=0 // pred_region
    _
  $region25: #{tpu_custom_call.1} parent=0 // pred_fallthru
    _
  // Predicated region
  $region26: #{tpu_custom_call.1} parent=0 // pred_check
    _
  $region27: #{tpu_custom_call.1} parent=0 // pred_check_branch
    %252 = sbr.rel (0) target = $region29
  $region28: #{tpu_custom_call.1} parent=0 // pred_region
    _
  $region29: #{tpu_custom_call.1} parent=0 // pred_fallthru
    _

// kernel: tpu_custom_call.1
$region0: #{tpu_custom_call.1}
  #allocation0 [shape = 'u32[]', space=smem, size = 0x4, offset = 0x4, fixed_abs, tag = 'smem constant byte address 0x4 - core index']
  #allocation1 [shape = 'u32[144,128]{1,0:T(1,128)}', space=vmem, size = 0x12000, scoped, tag = 'internal scratch']
  %s0 = inlined_call_operand.vmem [shape: f32[32,32], index: 0, kind: input, shape index: {}]
  %s1 = inlined_call_operand.vmem [shape: f32[32,16], index: 1, kind: input, shape index: {}]
  %s2 = inlined_call_operand.vmem [shape: f32[1,16], index: 2, kind: input, shape index: {}]
  %s3 = inlined_call_operand.vmem [shape: f32[16,2], index: 3, kind: input, shape index: {}]
  %s4 = inlined_call_operand.vmem [shape: f32[1,2], index: 4, kind: input, shape index: {}]
  %s5 = inlined_call_operand.vmem [shape: f32[32,2], index: 5, kind: output, shape index: {}]
  %s6 = sld [smem:[#allocation0]]
  $region30: #{tpu_custom_call.1} parent=0
    _
  %s8 = ssub.s32 1, %s6
  %s9 = scalar_select 0, %s8, %s6
  // Predicated region
  $region2: #{tpu_custom_call.1} parent=0 // pred_check
    _
  $region3: #{tpu_custom_call.1} parent=0 // pred_check_branch
    %11 = sbr.rel (0) target = $region5
  $region4: #{tpu_custom_call.1} parent=0 // pred_region
    _
  $region5: #{tpu_custom_call.1} parent=0 // pred_fallthru
    _
  // Predicated region
  $region6: #{tpu_custom_call.1} parent=0 // pred_check
    _
  $region7: #{tpu_custom_call.1} parent=0 // pred_check_branch
    %13 = sbr.rel (0) target = $region9
  $region8: #{tpu_custom_call.1} parent=0 // pred_region
    _
  $region9: #{tpu_custom_call.1} parent=0 // pred_fallthru
    _
  // Predicated region
  $region10: #{tpu_custom_call.1} parent=0 // pred_check
    _
  $region11: #{tpu_custom_call.1} parent=0 // pred_check_branch
    %15 = sbr.rel (0) target = $region13
  $region12: #{tpu_custom_call.1} parent=0 // pred_region
    _
  $region13: #{tpu_custom_call.1} parent=0 // pred_fallthru
    _
  // Predicated region
  $region14: #{tpu_custom_call.1} parent=0 // pred_check
    _
  $region15: #{tpu_custom_call.1} parent=0 // pred_check_branch
    %17 = sbr.rel (0) target = $region17
  $region16: #{tpu_custom_call.1} parent=0 // pred_region
    _
  $region17: #{tpu_custom_call.1} parent=0 // pred_fallthru
    _
  // Predicated region
  $region18: #{tpu_custom_call.1} parent=0 // pred_check
    _
  $region19: #{tpu_custom_call.1} parent=0 // pred_check_branch
    %19 = sbr.rel (0) target = $region21
  $region20: #{tpu_custom_call.1} parent=0 // pred_region
    _
  $region21: #{tpu_custom_call.1} parent=0 // pred_fallthru
    _
  %v20 = vld [vmem:[%s0] sm:$0xff]
  %v21 = vld [vmem:[%s0 + $0x8] sm:$0xff]
  %v22 = vld [vmem:[%s0 + $0x10] sm:$0xff]
  %v23 = vld [vmem:[%s0 + $0x18] sm:$0xff]
  %v24 = vld [vmem:[%s1] sm:$0xff]
  %v25 = vld [vmem:[%s1 + $0x8] sm:$0xff]
  %v26 = vld [vmem:[%s1 + $0x10] sm:$0xff]
  %v27 = vld [vmem:[%s1 + $0x18] sm:$0xff]
  %v28 = vld [vmem:[%s2] sm:$0x1]
  %v30 = vlaneseq
  %v31 = vshrl.u32 %v30, 7
  %v32 = vsub.s32 0, %v31
  %v33 = vrot.slane %v28, %v32
  %vm35 = vcmask 261120
  %v37 = vsel %vm35, %v20, 0
  %v40 = vsel %vm35, %v21, 0
  %v43 = vsel %vm35, %v22, 0
  %v46 = vsel %vm35, %v23, 0
  %48 = vmatprep.subr.mxu0 0.0
  %49 = vmatpush1.msra.mxu0 0.0
  %50 = vmatprep.subr.mxu0 0.0
  %51 = vmatpush1.msra.mxu0 0.0
  %52 = vmatprep.subr.mxu0 0.0
  %53 = vmatpush1.msra.mxu0 0.0
  %54 = vmatprep.subr.mxu0 0.0
  %55 = vmatpush1.msra.mxu0 0.0
  %56 = vmatprep.subr.mxu0 0.0
  %57 = vmatpush1.msra.mxu0 0.0
  %58 = vmatprep.subr.mxu0 0.0
  %59 = vmatpush1.msra.mxu0 0.0
  %60 = vmatprep.subr.mxu0 0.0
  %61 = vmatpush1.msra.mxu0 0.0
  %62 = vmatprep.subr.mxu0 0.0
  %63 = vmatpush1.msra.mxu0 0.0
  %64 = vmatprep.subr.mxu0 0.0
  %65 = vmatpush1.msra.mxu0 0.0
  %66 = vmatprep.subr.mxu0 0.0
  %67 = vmatpush1.msra.mxu0 0.0
  %68 = vmatprep.subr.mxu0 0.0
  %69 = vmatpush1.msra.mxu0 0.0
  %70 = vmatprep.subr.mxu0 0.0
  %71 = vmatpush1.msra.mxu0 0.0
  %72 = vmatprep.subr.mxu0 0.0
  %73 = vmatpush1.msra.mxu0 %v27
  %74 = vmatprep.subr.mxu0 0.0
  %75 = vmatpush1.msra.mxu0 %v26
  %76 = vmatprep.subr.mxu0 0.0
  %77 = vmatpush1.msra.mxu0 %v25
  %78 = vmatprep.subr.mxu0 0.0
  %79 = vmatpush1.msra.mxu0 %v24
  %80 = vmatprep.subr.mxu0 0.0
  %81 = vmatpush2.msra.mxu0 0.0
  %82 = vmatprep.subr.mxu0 0.0
  %83 = vmatpush2.msra.mxu0 0.0
  %84 = vmatprep.subr.mxu0 0.0
  %85 = vmatpush2.msra.mxu0 0.0
  %86 = vmatprep.subr.mxu0 0.0
  %87 = vmatpush2.msra.mxu0 0.0
  %88 = vmatprep.subr.mxu0 0.0
  %89 = vmatpush2.msra.mxu0 0.0
  %90 = vmatprep.subr.mxu0 0.0
  %91 = vmatpush2.msra.mxu0 0.0
  %92 = vmatprep.subr.mxu0 0.0
  %93 = vmatpush2.msra.mxu0 0.0
  %94 = vmatprep.subr.mxu0 0.0
  %95 = vmatpush2.msra.mxu0 0.0
  %96 = vmatprep.subr.mxu0 0.0
  %97 = vmatpush2.msra.mxu0 0.0
  %98 = vmatprep.subr.mxu0 0.0
  %99 = vmatpush2.msra.mxu0 0.0
  %100 = vmatprep.subr.mxu0 0.0
  %101 = vmatpush2.msra.mxu0 0.0
  %102 = vmatprep.subr.mxu0 0.0
  %103 = vmatpush2.msra.mxu0 0.0
  %104 = vmatprep.subr.mxu0 0.0
  %105 = vmatpush2.msra.mxu0 0.0
  %106 = vmatprep.subr.mxu0 0.0
  %107 = vmatpush2.msra.mxu0 0.0
  %108 = vmatprep.subr.mxu0 0.0
  %109 = vmatpush2.msra.mxu0 0.0
  %110 = vmatprep.subr.mxu0 0.0
  %111 = vmatpush2.msra.mxu0 0.0
  %112 = vmatprep.mubr.f32.mxu0 0.0
  %113 = vmatmul.mubr.f32.gmra.mxu0 %v37
  %v114 = vpop.f32.mrf.mxu0
  %v115 = vadd.f32 %v33, %v114
  %v116 = vpop.f32.mrf.mxu0
  %117 = vmatprep.mubr.f32.mxu0 0.0
  %118 = vmatmul.mubr.f32.gmra.mxu0 %v40
  %v119 = vpop.f32.mrf.mxu0
  %v120 = vadd.f32 %v33, %v119
  %v121 = vpop.f32.mrf.mxu0
  %122 = vmatprep.mubr.f32.mxu0 0.0
  %123 = vmatmul.mubr.f32.gmra.mxu0 %v43
  %v124 = vpop.f32.mrf.mxu0
  %v125 = vadd.f32 %v33, %v124
  %v126 = vpop.f32.mrf.mxu0
  %127 = vmatprep.mubr.f32.mxu0 0.0
  %128 = vmatmul.mubr.f32.gmra.mxu0 %v46
  %v129 = vpop.f32.mrf.mxu0
  %v130 = vadd.f32 %v33, %v129
  %v131 = vpop.f32.mrf.mxu0
  %132 = vdwg.mxu0
  %v133 = vmax.f32 %v115, 0.0
  %v134 = vmax.f32 %v120, 0.0
  %v135 = vmax.f32 %v125, 0.0
  %v136 = vmax.f32 %v130, 0.0
  %v137 = vld [vmem:[%s3] sm:$0xff]
  %v138 = vld [vmem:[%s3 + $0x8] sm:$0xff]
  %v139 = vld [vmem:[%s4] sm:$0x1]
  %v141 = vlaneseq
  %v142 = vshrl.u32 %v141, 7
  %v143 = vsub.s32 0, %v142
  %v144 = vrot.slane %v139, %v143
  %vm146 = vcmask 130048
  %v148 = vsel %vm146, %v133, 0
  %v151 = vsel %vm146, %v134, 0
  %v154 = vsel %vm146, %v135, 0
  %v157 = vsel %vm146, %v136, 0
  %159 = vmatprep.subr.mxu0 0.0
  %160 = vmatpush1.msra.mxu0 0.0
  %161 = vmatprep.subr.mxu0 0.0
  %162 = vmatpush1.msra.mxu0 0.0
  %163 = vmatprep.subr.mxu0 0.0
  %164 = vmatpush1.msra.mxu0 0.0
  %165 = vmatprep.subr.mxu0 0.0
  %166 = vmatpush1.msra.mxu0 0.0
  %167 = vmatprep.subr.mxu0 0.0
  %168 = vmatpush1.msra.mxu0 0.0
  %169 = vmatprep.subr.mxu0 0.0
  %170 = vmatpush1.msra.mxu0 0.0
  %171 = vmatprep.subr.mxu0 0.0
  %172 = vmatpush1.msra.mxu0 0.0
  %173 = vmatprep.subr.mxu0 0.0
  %174 = vmatpush1.msra.mxu0 0.0
  %175 = vmatprep.subr.mxu0 0.0
  %176 = vmatpush1.msra.mxu0 0.0
  %177 = vmatprep.subr.mxu0 0.0
  %178 = vmatpush1.msra.mxu0 0.0
  %179 = vmatprep.subr.mxu0 0.0
  %180 = vmatpush1.msra.mxu0 0.0
  %181 = vmatprep.subr.mxu0 0.0
  %182 = vmatpush1.msra.mxu0 0.0
  %183 = vmatprep.subr.mxu0 0.0
  %184 = vmatpush1.msra.mxu0 0.0
  %185 = vmatprep.subr.mxu0 0.0
  %186 = vmatpush1.msra.mxu0 0.0
  %187 = vmatprep.subr.mxu0 0.0
  %188 = vmatpush1.msra.mxu0 %v138
  %189 = vmatprep.subr.mxu0 0.0
  %190 = vmatpush1.msra.mxu0 %v137
  %191 = vmatprep.subr.mxu0 0.0
  %192 = vmatpush2.msra.mxu0 0.0
  %193 = vmatprep.subr.mxu0 0.0
  %194 = vmatpush2.msra.mxu0 0.0
  %195 = vmatprep.subr.mxu0 0.0
  %196 = vmatpush2.msra.mxu0 0.0
  %197 = vmatprep.subr.mxu0 0.0
  %198 = vmatpush2.msra.mxu0 0.0
  %199 = vmatprep.subr.mxu0 0.0
  %200 = vmatpush2.msra.mxu0 0.0
  %201 = vmatprep.subr.mxu0 0.0
  %202 = vmatpush2.msra.mxu0 0.0
  %203 = vmatprep.subr.mxu0 0.0
  %204 = vmatpush2.msra.mxu0 0.0
  %205 = vmatprep.subr.mxu0 0.0
  %206 = vmatpush2.msra.mxu0 0.0
  %207 = vmatprep.subr.mxu0 0.0
  %208 = vmatpush2.msra.mxu0 0.0
  %209 = vmatprep.subr.mxu0 0.0
  %210 = vmatpush2.msra.mxu0 0.0
  %211 = vmatprep.subr.mxu0 0.0
  %212 = vmatpush2.msra.mxu0 0.0
  %213 = vmatprep.subr.mxu0 0.0
  %214 = vmatpush2.msra.mxu0 0.0
  %215 = vmatprep.subr.mxu0 0.0
  %216 = vmatpush2.msra.mxu0 0.0
  %217 = vmatprep.subr.mxu0 0.0
  %218 = vmatpush2.msra.mxu0 0.0
  %219 = vmatprep.subr.mxu0 0.0
  %220 = vmatpush2.msra.mxu0 0.0
  %221 = vmatprep.subr.mxu0 0.0
  %222 = vmatpush2.msra.mxu0 0.0
  %223 = vmatprep.mubr.f32.mxu0 0.0
  %224 = vmatmul.mubr.f32.gmra.mxu0 %v148
  %v225 = vpop.f32.mrf.mxu0
  %v226 = vadd.f32 %v144, %v225
  %v227 = vpop.f32.mrf.mxu0
  %228 = vmatprep.mubr.f32.mxu0 0.0
  %229 = vmatmul.mubr.f32.gmra.mxu0 %v151
  %v230 = vpop.f32.mrf.mxu0
  %v231 = vadd.f32 %v144, %v230
  %v232 = vpop.f32.mrf.mxu0
  %233 = vmatprep.mubr.f32.mxu0 0.0
  %234 = vmatmul.mubr.f32.gmra.mxu0 %v154
  %v235 = vpop.f32.mrf.mxu0
  %v236 = vadd.f32 %v144, %v235
  %v237 = vpop.f32.mrf.mxu0
  %238 = vmatprep.mubr.f32.mxu0 0.0
  %239 = vmatmul.mubr.f32.gmra.mxu0 %v157
  %v240 = vpop.f32.mrf.mxu0
  %v241 = vadd.f32 %v144, %v240
  %v242 = vpop.f32.mrf.mxu0
  %243 = vdwg.mxu0
  %vm244 = vcmask 15360
  %245 = vst.msk [vmem:[%s5] sm:$0xff] %vm244, %v226
  %246 = vst.msk [vmem:[%s5 + $0x8] sm:$0xff] %vm244, %v231
  %247 = vst.msk [vmem:[%s5 + $0x10] sm:$0xff] %vm244, %v236
  %248 = vst.msk [vmem:[%s5 + $0x18] sm:$0xff] %vm244, %v241
  // Predicated region
  $region22: #{tpu_custom_call.1} parent=0 // pred_check
    _
  $region23: #{tpu_custom_call.1} parent=0 // pred_check_branch
    %250 = sbr.rel (0) target = $region25
  $region24: #{tpu_custom_call.1} parent=0 // pred_region
    _
  $region25: #{tpu_custom_call.1} parent=0 // pred_fallthru
    _
  // Predicated region
  $region26: #{tpu_custom_call.1} parent=0 // pred_check
    _
  $region27: #{tpu_custom_call.1} parent=0 // pred_check_branch
    %252 = sbr.rel (0) target = $region29
  $region28: #{tpu_custom_call.1} parent=0 // pred_region
    _
  $region29: #{tpu_custom_call.1} parent=0 // pred_fallthru
    _

</llo_original>
